<compile_context>
chip_gen: v5e
topology: v5e:2x2
jax: 0.10.0
libtpu: 0.0.40
codegen_flags: <defaults>
</compile_context>

<pallas_src>
import functools

import jax
import jax.numpy as jnp
from jax import lax
from jax.experimental import pallas as pl
from jax.experimental.pallas import tpu as pltpu


def _round_up(x, m):
    return ((x + m - 1) // m) * m


def _packing(num_actions, latent_dim):
    """Returns (k rows packed per 128-lane output row, padded table rows, out lane width)."""
    if latent_dim % 128 == 0:
        k, d_out = 1, latent_dim                    # already lane-dense
    elif 128 % latent_dim == 0:
        k, d_out = 128 // latent_dim, 128           # pack k rows per vreg row
    else:
        k, d_out = 1, _round_up(latent_dim, 128)    # fall back to lane padding
    return k, _round_up(num_actions, 8), d_out


def pack_embedding_table(embedding):
    """Block-diagonal (k*A_pad, d_out) replication of the table.

    Build this once for a production table and pass it via `packed_table=` so
    the padded copy is not rebuilt on every lookup call.
    """
    num_actions, latent_dim = embedding.shape
    k, a_pad, d_out = _packing(num_actions, latent_dim)
    if k == 1 and a_pad == num_actions and d_out == latent_dim:
        return embedding                             # no padding copy needed
    tab = jnp.zeros((k * a_pad, d_out), embedding.dtype)
    for j in range(k):
        tab = tab.at[j * a_pad:j * a_pad + num_actions,
                     j * latent_dim:(j + 1) * latent_dim].set(embedding)
    return tab


def _embed_action_kernel(idx_ref, tab_ref, out_ref, *, num_actions, a_pad, k):
    # idx_ref : VMEM (TN, k)            ids (float or int); k rows packed per output row
    # tab_ref : VMEM (k*A_pad, D_out)   block-diagonal table, VMEM-resident
    # out_ref : VMEM (TN, D_out)        lane-dense packed gather result
    tn = out_ref.shape[0]

    # torch `.to(torch.long)`: float -> int truncates toward zero.
    idx = idx_ref[...].astype(jnp.int32)                       # (TN, k)
    # torch advanced indexing wraps a single negative index.
    idx = jnp.where(idx < 0, idx + num_actions, idx)
    # No clamp: an id still out of range gets no one-hot match -> all-zero row
    # (torch would raise; this is the memory-safe, documented choice here).
    valid = (idx >= 0) & (idx < num_actions)                   # (TN, k) bool

    iota = lax.broadcasted_iota(jnp.int32, (tn, k * a_pad), 1)  # hoisted, one vreg const
    onehot = jnp.zeros((tn, k * a_pad), dtype=tab_ref.dtype)
    for j in range(k):                                          # k is small & static (unrolled)
        col_j = idx[:, j:j + 1] + j * a_pad                     # (TN, 1) target column
        hit = (iota == col_j) & valid[:, j:j + 1]               # (TN, k*A_pad)
        onehot = onehot + hit.astype(tab_ref.dtype)

    # Single MXU matmul gathers k packed rows per output row. HIGHEST precision
    # keeps the 0/1 gather bit-faithful to the stored f32 embedding.
    out_ref[...] = jnp.dot(
        onehot, tab_ref[...],
        preferred_element_type=jnp.float32,
        precision=lax.Precision.HIGHEST,
    ).astype(out_ref.dtype)


def embed_action(indices, embedding, *, block_rows=4096, small_n_fallback=64,
                 packed_table=None):
    """indices: any shape (float or int action ids); embedding: (num_actions, latent_dim)."""
    orig_shape = indices.shape
    num_actions, latent_dim = embedding.shape

    idx_flat = indices.reshape(-1)
    n = idx_flat.shape[0]
    if n == 0:
        return jnp.zeros(orig_shape + (latent_dim,), embedding.dtype)

    # Tiny batches: kernel-launch + padding overhead dwarfs any kernel gain.
    if n <= small_n_fallback:
        idx = idx_flat.astype(jnp.int32)
        idx = jnp.where(idx < 0, idx + num_actions, idx)
        out = jnp.take(embedding, idx, axis=0, mode="fill", fill_value=0)
        return out.reshape(orig_shape + (latent_dim,))

    k, a_pad, d_out = _packing(num_actions, latent_dim)

    if packed_table is None:
        packed_table = pack_embedding_table(embedding)
    assert packed_table.shape == (k * a_pad, d_out) or (
        k == 1 and packed_table.shape == (num_actions, latent_dim)
    ), "packed_table does not match pack_embedding_table(embedding) layout"

    # --- row tiling (in packed output rows; each packed row holds k ids) -----
    n_rows = pl.cdiv(n, k)
    n_rows8 = _round_up(n_rows, 8)
    max_rows = max(8, _round_up(max(block_rows // k, 1), 8))
    tn_rows = min(max_rows, n_rows8)
    # Keep >= 2 grid steps when there is real work so ("parallel",) can shard
    # across both TensorCores (v7x megacore).
    if tn_rows == n_rows8 and n_rows8 >= 64:
        tn_rows = max(8, _round_up(pl.cdiv(n_rows8, 2), 8))
    n_rows_pad = _round_up(n_rows8, tn_rows)
    grid = (n_rows_pad // tn_rows,)

    # --- index packing: (n_rows_pad, k), contiguous DMA, k useful lanes/row --
    total = n_rows_pad * k
    if total == n:
        idx2d = idx_flat.reshape(n_rows_pad, k)                 # pure layout, no copy
    else:
        pad = jnp.zeros((total - n,), idx_flat.dtype)           # pads gather row 0; sliced off below
        idx2d = jnp.concatenate([idx_flat, pad]).reshape(n_rows_pad, k)

    itemsize = jnp.dtype(embedding.dtype).itemsize
    out_bytes = n_rows_pad * d_out * itemsize
    tab_bytes = packed_table.size * jnp.dtype(packed_table.dtype).itemsize
    cost = pl.CostEstimate(
        flops=2 * n_rows_pad * (k * a_pad) * d_out,
        transcendentals=0,
        bytes_accessed=int(idx2d.size * jnp.dtype(idx2d.dtype).itemsize
                           + tab_bytes + out_bytes),
    )

    # Conservative VMEM estimate (idx tiles are lane-padded to 128 in VMEM).
    est_vmem = (2 * tab_bytes
                + 2 * tn_rows * 128 * 4
                + 2 * tn_rows * d_out * itemsize
                + tn_rows * k * a_pad * 4)
    vmem_limit = int(min(est_vmem + (4 << 20), 128 << 20)) if est_vmem > (28 << 20) else None

    compiler_params = pltpu.CompilerParams(
        dimension_semantics=("parallel",),        # tiles independent -> megacore split
        vmem_limit_bytes=vmem_limit,
    )

    kernel = functools.partial(
        _embed_action_kernel, num_actions=num_actions, a_pad=a_pad, k=k
    )

    def _call(table_pipeline_mode):
        table_kwargs = {}
        if table_pipeline_mode is not None:
            table_kwargs["pipeline_mode"] = table_pipeline_mode
        grid_spec = pltpu.PrefetchScalarGridSpec(
            num_scalar_prefetch=0,
            grid=grid,
            in_specs=[
                pl.BlockSpec((tn_rows, k), lambda i: (i, 0)),                # id tile
                pl.BlockSpec(packed_table.shape, lambda i: (0, 0),           # table, resident
                             **table_kwargs),
            ],
            out_specs=pl.BlockSpec((tn_rows, d_out), lambda i: (i, 0)),
        )
        return pl.pallas_call(
            kernel,
            out_shape=jax.ShapeDtypeStruct((n_rows_pad, d_out), embedding.dtype),
            grid_spec=grid_spec,
            compiler_params=compiler_params,
            cost_estimate=cost,
        )(idx2d, packed_table)

    try:
        # Constant-index table block: a single buffer is enough (halves its VMEM).
        mode = pl.Buffered(1) if hasattr(pl, "Buffered") else None
        out_packed = _call(mode)
    except Exception:  # older jax without BlockSpec pipeline_mode support
        out_packed = _call(None)

    # --- unpack: pure layout when shapes divide cleanly ----------------------
    if k > 1:
        out_flat = out_packed.reshape(n_rows_pad * k, latent_dim)   # d_out == k*latent_dim
        if n_rows_pad * k != n:
            out_flat = out_flat[:n]
    else:
        out_flat = out_packed
        if d_out != latent_dim:
            out_flat = out_flat[:, :latent_dim]
        if n_rows_pad != n:
            out_flat = out_flat[:n]

    return out_flat.reshape(orig_shape + (latent_dim,))


if __name__ == "__main__":
    key = jax.random.PRNGKey(0)
    k_emb, k_idx, k_idx2 = jax.random.split(key, 3)

    num_actions, latent_dim = 8, 32

    # Deterministic "parameter" init (analog of torch.randn(num_actions, latent_dim)).
    action_embedding = jax.random.normal(
        k_emb, (num_actions, latent_dim), dtype=jnp.float32
    )

    # --- Test 1: module-typical (B, 1) float action ids; force the Pallas path
    batch = 2
    inp = jax.random.randint(k_idx, (batch, 1), 0, num_actions).astype(jnp.float32)

    out = embed_action(inp, action_embedding, small_n_fallback=0)
    out = jax.block_until_ready(out)

    ref = action_embedding[inp.astype(jnp.int32).reshape(-1)].reshape(
        batch, 1, latent_dim
    )
    assert out.shape == (batch, 1, latent_dim), out.shape
    assert out.dtype == jnp.float32
    assert bool(jnp.allclose(out, ref, atol=1e-6, rtol=1e-6)), "mismatch (small)"

    # --- Test 2: larger flat batch exercising the packed multi-tile grid -----
    n_big = 4096
    inp_big = jax.random.randint(k_idx2, (n_big,), 0, num_actions)

    out_big = jax.block_until_ready(embed_action(inp_big, action_embedding))
    ref_big = action_embedding[inp_big]
    assert out_big.shape == (n_big, latent_dim), out_big.shape
    assert bool(jnp.allclose(out_big, ref_big, atol=1e-6, rtol=1e-6)), "mismatch (large)"

    # --- Test 3: negative-id wrap via the tiny-n jnp.take fallback path ------
    inp_neg = jnp.array([[-1.0], [3.0]], jnp.float32)
    out_neg = jax.block_until_ready(embed_action(inp_neg, action_embedding))
    ref_neg = action_embedding[jnp.array([num_actions - 1, 3])].reshape(2, 1, latent_dim)
    assert bool(jnp.allclose(out_neg, ref_neg)), "mismatch (negative wrap)"

    print("KERNEL_OK")
</pallas_src>

<mosaic_0001>
module attributes {stable_mosaic.version = 11 : i64} {
  func.func @_embed_action_kernel(%arg0: i32, %arg1: memref<8x4xf32, #tpu.memory_space<vmem>>, %arg2: memref<32x128xf32, #tpu.memory_space<vmem>>, %arg3: memref<8x128xf32, #tpu.memory_space<vmem>>) attributes {dimension_semantics = [#tpu.dimension_semantics<parallel>], iteration_bounds = array<i64: 1>, scalar_prefetch = 0 : i64, scratch_operands = 0 : i64, tpu.core_type = #tpu.core_type<tc>, window_params = [{transform_indices = @transform_0, window_bounds = array<i64: 8, 4>}, {pipeline_mode = #tpu.pipeline_mode<synchronous>, transform_indices = @transform_1, window_bounds = array<i64: 32, 128>}, {transform_indices = @transform_2, window_bounds = array<i64: 8, 128>}]} {
    %c0 = arith.constant 0 : index
    %c0_0 = arith.constant 0 : index
    %0 = vector.load %arg1[%c0, %c0_0] : memref<8x4xf32, #tpu.memory_space<vmem>>, vector<8x4xf32>
    %1 = arith.fptosi %0 : vector<8x4xf32> to vector<8x4xi32>
    %c0_i32 = arith.constant 0 : i32
    %2 = vector.broadcast %c0_i32 : i32 to vector<8x4xi32>
    %3 = arith.cmpi slt, %1, %2 : vector<8x4xi32>
    %c8_i32 = arith.constant 8 : i32
    %4 = vector.broadcast %c8_i32 : i32 to vector<8x4xi32>
    %5 = arith.addi %1, %4 : vector<8x4xi32>
    %6 = arith.select %3, %5, %1 : vector<8x4xi1>, vector<8x4xi32>
    %c0_i32_1 = arith.constant 0 : i32
    %7 = vector.broadcast %c0_i32_1 : i32 to vector<8x4xi32>
    %8 = arith.cmpi sge, %6, %7 : vector<8x4xi32>
    %c8_i32_2 = arith.constant 8 : i32
    %9 = vector.broadcast %c8_i32_2 : i32 to vector<8x4xi32>
    %10 = arith.cmpi slt, %6, %9 : vector<8x4xi32>
    %11 = arith.andi %8, %10 : vector<8x4xi1>
    %12 = tpu.iota {dimensions = array<i32: 1>} : vector<8x32xi32>
    %cst = arith.constant 0.000000e+00 : f32
    %13 = vector.broadcast %cst : f32 to vector<8x32xf32>
    %14 = vector.extract_strided_slice %6 {offsets = [0, 0], sizes = [8, 1], strides = [1, 1]} : vector<8x4xi32> to vector<8x1xi32>
    %c0_i32_3 = arith.constant 0 : i32
    %15 = vector.broadcast %c0_i32_3 : i32 to vector<8x1xi32>
    %16 = arith.addi %14, %15 : vector<8x1xi32>
    %17 = vector.broadcast %16 : vector<8x1xi32> to vector<8x32xi32>
    %18 = arith.cmpi eq, %12, %17 : vector<8x32xi32>
    %19 = vector.extract_strided_slice %11 {offsets = [0, 0], sizes = [8, 1], strides = [1, 1]} : vector<8x4xi1> to vector<8x1xi1>
    %20 = vector.broadcast %19 : vector<8x1xi1> to vector<8x32xi1>
    %21 = arith.andi %18, %20 : vector<8x32xi1>
    %22 = arith.extui %21 : vector<8x32xi1> to vector<8x32xi32>
    %23 = arith.sitofp %22 : vector<8x32xi32> to vector<8x32xf32>
    %24 = arith.addf %13, %23 : vector<8x32xf32>
    %25 = vector.extract_strided_slice %6 {offsets = [0, 1], sizes = [8, 1], strides = [1, 1]} : vector<8x4xi32> to vector<8x1xi32>
    %c8_i32_4 = arith.constant 8 : i32
    %26 = vector.broadcast %c8_i32_4 : i32 to vector<8x1xi32>
    %27 = arith.addi %25, %26 : vector<8x1xi32>
    %28 = vector.broadcast %27 : vector<8x1xi32> to vector<8x32xi32>
    %29 = arith.cmpi eq, %12, %28 : vector<8x32xi32>
    %30 = vector.extract_strided_slice %11 {offsets = [0, 1], sizes = [8, 1], strides = [1, 1]} : vector<8x4xi1> to vector<8x1xi1>
    %31 = vector.broadcast %30 : vector<8x1xi1> to vector<8x32xi1>
    %32 = arith.andi %29, %31 : vector<8x32xi1>
    %33 = arith.extui %32 : vector<8x32xi1> to vector<8x32xi32>
    %34 = arith.sitofp %33 : vector<8x32xi32> to vector<8x32xf32>
    %35 = arith.addf %24, %34 : vector<8x32xf32>
    %36 = vector.extract_strided_slice %6 {offsets = [0, 2], sizes = [8, 1], strides = [1, 1]} : vector<8x4xi32> to vector<8x1xi32>
    %c16_i32 = arith.constant 16 : i32
    %37 = vector.broadcast %c16_i32 : i32 to vector<8x1xi32>
    %38 = arith.addi %36, %37 : vector<8x1xi32>
    %39 = vector.broadcast %38 : vector<8x1xi32> to vector<8x32xi32>
    %40 = arith.cmpi eq, %12, %39 : vector<8x32xi32>
    %41 = vector.extract_strided_slice %11 {offsets = [0, 2], sizes = [8, 1], strides = [1, 1]} : vector<8x4xi1> to vector<8x1xi1>
    %42 = vector.broadcast %41 : vector<8x1xi1> to vector<8x32xi1>
    %43 = arith.andi %40, %42 : vector<8x32xi1>
    %44 = arith.extui %43 : vector<8x32xi1> to vector<8x32xi32>
    %45 = arith.sitofp %44 : vector<8x32xi32> to vector<8x32xf32>
    %46 = arith.addf %35, %45 : vector<8x32xf32>
    %47 = vector.extract_strided_slice %6 {offsets = [0, 3], sizes = [8, 1], strides = [1, 1]} : vector<8x4xi32> to vector<8x1xi32>
    %c24_i32 = arith.constant 24 : i32
    %48 = vector.broadcast %c24_i32 : i32 to vector<8x1xi32>
    %49 = arith.addi %47, %48 : vector<8x1xi32>
    %50 = vector.broadcast %49 : vector<8x1xi32> to vector<8x32xi32>
    %51 = arith.cmpi eq, %12, %50 : vector<8x32xi32>
    %52 = vector.extract_strided_slice %11 {offsets = [0, 3], sizes = [8, 1], strides = [1, 1]} : vector<8x4xi1> to vector<8x1xi1>
    %53 = vector.broadcast %52 : vector<8x1xi1> to vector<8x32xi1>
    %54 = arith.andi %51, %53 : vector<8x32xi1>
    %55 = arith.extui %54 : vector<8x32xi1> to vector<8x32xi32>
    %56 = arith.sitofp %55 : vector<8x32xi32> to vector<8x32xf32>
    %57 = arith.addf %46, %56 : vector<8x32xf32>
    %c0_5 = arith.constant 0 : index
    %c0_6 = arith.constant 0 : index
    %58 = vector.load %arg2[%c0_5, %c0_6] : memref<32x128xf32, #tpu.memory_space<vmem>>, vector<32x128xf32>
    %cst_7 = arith.constant dense<0.000000e+00> : vector<8x128xf32>
    %59 = tpu.matmul %57, %58, %cst_7 {dimension_numbers = #tpu.dot_dimension_numbers<[1], [0], [0], [1], [0, 0, 1, 1], [], []>, precision = #tpu.contract_precision<fp32>} : vector<8x32xf32>, vector<32x128xf32>, vector<8x128xf32> -> vector<8x128xf32>
    %c0_8 = arith.constant 0 : index
    %c0_9 = arith.constant 0 : index
    %60 = vector.load %arg3[%c0_8, %c0_9] : memref<8x128xf32, #tpu.memory_space<vmem>>, vector<8x128xf32>
    tpu.vector_store %arg3[%c0_8, %c0_9], %59 {strides = array<i32>} : memref<8x128xf32, #tpu.memory_space<vmem>>, vector<8x128xf32>,
    return
  }
  func.func @transform_0(%arg0: i32) -> (i32, i32) {
    %c0_i32 = arith.constant 0 : i32
    %c0_i32_0 = arith.constant 0 : i32
    return %arg0, %c0_i32 : i32, i32
  }
  func.func @transform_1(%arg0: i32) -> (i32, i32) {
    %c0_i32 = arith.constant 0 : i32
    %c0_i32_0 = arith.constant 0 : i32
    %c0_i32_1 = arith.constant 0 : i32
    return %c0_i32, %c0_i32_0 : i32, i32
  }
  func.func @transform_2(%arg0: i32) -> (i32, i32) {
    %c0_i32 = arith.constant 0 : i32
    %c0_i32_0 = arith.constant 0 : i32
    return %arg0, %c0_i32 : i32, i32
  }
}

module attributes {stable_mosaic.version = 11 : i64} {
  func.func @_embed_action_kernel(%arg0: i32, %arg1: memref<8x4xf32, #tpu.memory_space<vmem>>, %arg2: memref<32x128xf32, #tpu.memory_space<vmem>>, %arg3: memref<8x128xf32, #tpu.memory_space<vmem>>) attributes {dimension_semantics = [#tpu.dimension_semantics<parallel>], iteration_bounds = array<i64: 1>, scalar_prefetch = 0 : i64, scratch_operands = 0 : i64, tpu.core_type = #tpu.core_type<tc>, window_params = [{transform_indices = @transform_0, window_bounds = array<i64: 8, 4>}, {pipeline_mode = #tpu.pipeline_mode<synchronous>, transform_indices = @transform_1, window_bounds = array<i64: 32, 128>}, {transform_indices = @transform_2, window_bounds = array<i64: 8, 128>}]} {
    %c0 = arith.constant 0 : index
    %c0_0 = arith.constant 0 : index
    %0 = vector.load %arg1[%c0, %c0_0] : memref<8x4xf32, #tpu.memory_space<vmem>>, vector<8x4xf32>
    %1 = arith.fptosi %0 : vector<8x4xf32> to vector<8x4xi32>
    %c0_i32 = arith.constant 0 : i32
    %2 = vector.broadcast %c0_i32 : i32 to vector<8x4xi32>
    %3 = arith.cmpi slt, %1, %2 : vector<8x4xi32>
    %c8_i32 = arith.constant 8 : i32
    %4 = vector.broadcast %c8_i32 : i32 to vector<8x4xi32>
    %5 = arith.addi %1, %4 : vector<8x4xi32>
    %6 = arith.select %3, %5, %1 : vector<8x4xi1>, vector<8x4xi32>
    %c0_i32_1 = arith.constant 0 : i32
    %7 = vector.broadcast %c0_i32_1 : i32 to vector<8x4xi32>
    %8 = arith.cmpi sge, %6, %7 : vector<8x4xi32>
    %c8_i32_2 = arith.constant 8 : i32
    %9 = vector.broadcast %c8_i32_2 : i32 to vector<8x4xi32>
    %10 = arith.cmpi slt, %6, %9 : vector<8x4xi32>
    %11 = arith.andi %8, %10 : vector<8x4xi1>
    %12 = tpu.iota {dimensions = array<i32: 1>} : vector<8x32xi32>
    %cst = arith.constant 0.000000e+00 : f32
    %13 = vector.broadcast %cst : f32 to vector<8x32xf32>
    %14 = vector.extract_strided_slice %6 {offsets = [0, 0], sizes = [8, 1], strides = [1, 1]} : vector<8x4xi32> to vector<8x1xi32>
    %c0_i32_3 = arith.constant 0 : i32
    %15 = vector.broadcast %c0_i32_3 : i32 to vector<8x1xi32>
    %16 = arith.addi %14, %15 : vector<8x1xi32>
    %17 = vector.broadcast %16 : vector<8x1xi32> to vector<8x32xi32>
    %18 = arith.cmpi eq, %12, %17 : vector<8x32xi32>
    %19 = vector.extract_strided_slice %11 {offsets = [0, 0], sizes = [8, 1], strides = [1, 1]} : vector<8x4xi1> to vector<8x1xi1>
    %20 = vector.broadcast %19 : vector<8x1xi1> to vector<8x32xi1>
    %21 = arith.andi %18, %20 : vector<8x32xi1>
    %22 = arith.extui %21 : vector<8x32xi1> to vector<8x32xi32>
    %23 = arith.sitofp %22 : vector<8x32xi32> to vector<8x32xf32>
    %24 = arith.addf %13, %23 : vector<8x32xf32>
    %25 = vector.extract_strided_slice %6 {offsets = [0, 1], sizes = [8, 1], strides = [1, 1]} : vector<8x4xi32> to vector<8x1xi32>
    %c8_i32_4 = arith.constant 8 : i32
    %26 = vector.broadcast %c8_i32_4 : i32 to vector<8x1xi32>
    %27 = arith.addi %25, %26 : vector<8x1xi32>
    %28 = vector.broadcast %27 : vector<8x1xi32> to vector<8x32xi32>
    %29 = arith.cmpi eq, %12, %28 : vector<8x32xi32>
    %30 = vector.extract_strided_slice %11 {offsets = [0, 1], sizes = [8, 1], strides = [1, 1]} : vector<8x4xi1> to vector<8x1xi1>
    %31 = vector.broadcast %30 : vector<8x1xi1> to vector<8x32xi1>
    %32 = arith.andi %29, %31 : vector<8x32xi1>
    %33 = arith.extui %32 : vector<8x32xi1> to vector<8x32xi32>
    %34 = arith.sitofp %33 : vector<8x32xi32> to vector<8x32xf32>
    %35 = arith.addf %24, %34 : vector<8x32xf32>
    %36 = vector.extract_strided_slice %6 {offsets = [0, 2], sizes = [8, 1], strides = [1, 1]} : vector<8x4xi32> to vector<8x1xi32>
    %c16_i32 = arith.constant 16 : i32
    %37 = vector.broadcast %c16_i32 : i32 to vector<8x1xi32>
    %38 = arith.addi %36, %37 : vector<8x1xi32>
    %39 = vector.broadcast %38 : vector<8x1xi32> to vector<8x32xi32>
    %40 = arith.cmpi eq, %12, %39 : vector<8x32xi32>
    %41 = vector.extract_strided_slice %11 {offsets = [0, 2], sizes = [8, 1], strides = [1, 1]} : vector<8x4xi1> to vector<8x1xi1>
    %42 = vector.broadcast %41 : vector<8x1xi1> to vector<8x32xi1>
    %43 = arith.andi %40, %42 : vector<8x32xi1>
    %44 = arith.extui %43 : vector<8x32xi1> to vector<8x32xi32>
    %45 = arith.sitofp %44 : vector<8x32xi32> to vector<8x32xf32>
    %46 = arith.addf %35, %45 : vector<8x32xf32>
    %47 = vector.extract_strided_slice %6 {offsets = [0, 3], sizes = [8, 1], strides = [1, 1]} : vector<8x4xi32> to vector<8x1xi32>
    %c24_i32 = arith.constant 24 : i32
    %48 = vector.broadcast %c24_i32 : i32 to vector<8x1xi32>
    %49 = arith.addi %47, %48 : vector<8x1xi32>
    %50 = vector.broadcast %49 : vector<8x1xi32> to vector<8x32xi32>
    %51 = arith.cmpi eq, %12, %50 : vector<8x32xi32>
    %52 = vector.extract_strided_slice %11 {offsets = [0, 3], sizes = [8, 1], strides = [1, 1]} : vector<8x4xi1> to vector<8x1xi1>
    %53 = vector.broadcast %52 : vector<8x1xi1> to vector<8x32xi1>
    %54 = arith.andi %51, %53 : vector<8x32xi1>
    %55 = arith.extui %54 : vector<8x32xi1> to vector<8x32xi32>
    %56 = arith.sitofp %55 : vector<8x32xi32> to vector<8x32xf32>
    %57 = arith.addf %46, %56 : vector<8x32xf32>
    %c0_5 = arith.constant 0 : index
    %c0_6 = arith.constant 0 : index
    %58 = vector.load %arg2[%c0_5, %c0_6] : memref<32x128xf32, #tpu.memory_space<vmem>>, vector<32x128xf32>
    %cst_7 = arith.constant dense<0.000000e+00> : vector<8x128xf32>
    %59 = tpu.matmul %57, %58, %cst_7 {dimension_numbers = #tpu.dot_dimension_numbers<[1], [0], [0], [1], [0, 0, 1, 1], [], []>, precision = #tpu.contract_precision<fp32>} : vector<8x32xf32>, vector<32x128xf32>, vector<8x128xf32> -> vector<8x128xf32>
    %c0_8 = arith.constant 0 : index
    %c0_9 = arith.constant 0 : index
    %60 = vector.load %arg3[%c0_8, %c0_9] : memref<8x128xf32, #tpu.memory_space<vmem>>, vector<8x128xf32>
    tpu.vector_store %arg3[%c0_8, %c0_9], %59 {strides = array<i32>} : memref<8x128xf32, #tpu.memory_space<vmem>>, vector<8x128xf32>,
    return
  }
  func.func @transform_0(%arg0: i32) -> (i32, i32) {
    %c0_i32 = arith.constant 0 : i32
    %c0_i32_0 = arith.constant 0 : i32
    return %arg0, %c0_i32 : i32, i32
  }
  func.func @transform_1(%arg0: i32) -> (i32, i32) {
    %c0_i32 = arith.constant 0 : i32
    %c0_i32_0 = arith.constant 0 : i32
    %c0_i32_1 = arith.constant 0 : i32
    return %c0_i32, %c0_i32_0 : i32, i32
  }
  func.func @transform_2(%arg0: i32) -> (i32, i32) {
    %c0_i32 = arith.constant 0 : i32
    %c0_i32_0 = arith.constant 0 : i32
    return %arg0, %c0_i32 : i32, i32
  }
}

</mosaic_0001>

<llo_original>
// kernel: tpu_custom_call.1
$region0: #{tpu_custom_call.1}
  #allocation0 [shape = 'u32[]', space=smem, size = 0x4, offset = 0x4, fixed_abs, tag = 'smem constant byte address 0x4 - core index']
  #allocation1 [shape = 'u32[72,128]{1,0:T(1,128)}', space=vmem, size = 0x9000, scoped, tag = 'internal scratch']
  %s0 = inlined_call_operand.vmem [shape: f32[8,4], index: 0, kind: input, shape index: {}]
  %s1 = inlined_call_operand.hbm [shape: f32[32,128], index: 1, kind: input, shape index: {}]
  %s2 = inlined_call_operand.hbm [shape: f32[8,128], index: 2, kind: output, shape index: {}]
  %s3 = sld [smem:[#allocation0]]
  $region22: #{tpu_custom_call.1} parent=0
    _
  %s5 = ssub.s32 1, %s3
  %s6 = scalar_select 0, %s5, %s3
  $region1: #{tpu_custom_call.1} parent=0
    #allocation2 [shape = 'u8[16384]{0}', space=vmem, size = 0x4000, scoped, tag = 'input window, operand 1, single buffered']
    #allocation3 [shape = 's32[1]{0}', space=sflag, size = 0x4, scoped, tag = 'scoped memory for tpu_custom_call.1']
    #allocation4 [shape = 's32[1]{0}', space=sflag, size = 0x4, scoped, tag = 'scoped memory for tpu_custom_call.1']
    #allocation5 [shape = 'u8[4096]{0}', space=vmem, size = 0x1000, scoped, tag = 'output window, operand 0, single buffered']
    %7 = vsyncpa [#allocation3], 0
    %8 = vsyncpa [#allocation4], 0
    // Predicated region
    $region2: #{tpu_custom_call.1} parent=1 // pred_check
      _
    $region3: #{tpu_custom_call.1} parent=1 // pred_check_branch
      %10 = sbr.rel (0) target = $region5
    $region4: #{tpu_custom_call.1} parent=1 // pred_region
      _
    $region5: #{tpu_custom_call.1} parent=1 // pred_fallthru
      _
    // Predicated region
    $region6: #{tpu_custom_call.1} parent=1 // pred_check
      _
    $region7: #{tpu_custom_call.1} parent=1 // pred_check_branch
      %12 = sbr.rel (0) target = $region9
    $region8: #{tpu_custom_call.1} parent=1 // pred_region
      %14 = vsyncadd [#allocation3], 0
      %s15 = sshll.u32 %s1, 4
      %s16 = int_to_ptr.hbm [resolvable:$true] %s15
      %s17 = sshll.u32 [#allocation2], 4
      %s18 = int_to_ptr.vmem [resolvable:$true] %s17
      %23 = dma.hbm_to_vmem [thread:$0]  %s16, 512, %s18, [#allocation3], 128, 128, 8
    $region9: #{tpu_custom_call.1} parent=1 // pred_fallthru
      _
    // Predicated region
    $region10: #{tpu_custom_call.1} parent=1 // pred_check
      _
    $region11: #{tpu_custom_call.1} parent=1 // pred_check_branch
      %25 = sbr.rel (0) target = $region13
    $region12: #{tpu_custom_call.1} parent=1 // pred_region
      %27 = dma.done [#allocation3], 512
    $region13: #{tpu_custom_call.1} parent=1 // pred_fallthru
      _
    %v28 = vld [vmem:[%s0] sm:$0xff]
    %v29 = vcvt.f32.s32.to.zero.pseudo %v28
    %vm30 = vcmp.lt.s32.totalorder %v29, 0
    %v31 = vadd.s32 %v29, 8
    %v32 = vsel %vm30, %v31, %v29
    %vm33 = vcmp.ge.s32.totalorder %v32, 0
    %vm34 = vcmp.lt.s32.totalorder %v32, 8
    %vm35 = vmand %vm33, %vm34
    %v36 = vlaneseq
    %v37 = vand.u32 %v36, 127
    %38 = vset.pattern.permute.xlu0 0
    %39 = vperm.xlu0 %38, %v32
    %v40 = vpop.permute.xlu0 %39
    %vm41 = vcmp.eq.s32.totalorder %v37, %v40
    %v42 = vsel %vm35, 1, 0
    %43 = vset.pattern.permute.xlu0 0
    %44 = vperm.xlu0 %43, %v42
    %v45 = vpop.permute.xlu0 %44
    %vm46 = vcmp.eq.s32.totalorder %v45, 1
    %vm47 = vmand %vm41, %vm46
    %v48 = vsel %vm47, 1, 0
    %v49 = vcvt.s32.f32 %v48
    %v50 = vadd.f32 %v49, 0.0
    %v51 = vadd.s32 %v32, 8
    %52 = vset.pattern.permute.xlu0 1
    %53 = vperm.xlu0 %52, %v51
    %v54 = vpop.permute.xlu0 %53
    %vm55 = vcmp.eq.s32.totalorder %v37, %v54
    %56 = vset.pattern.permute.xlu0 1
    %57 = vperm.xlu0 %56, %v42
    %v58 = vpop.permute.xlu0 %57
    %vm59 = vcmp.eq.s32.totalorder %v58, 1
    %vm60 = vmand %vm55, %vm59
    %v61 = vsel %vm60, 1, 0
    %v62 = vcvt.s32.f32 %v61
    %v63 = vadd.f32 %v50, %v62
    %v64 = vadd.s32 %v32, 16
    %65 = vset.pattern.permute.xlu0 2
    %66 = vperm.xlu0 %65, %v64
    %v67 = vpop.permute.xlu0 %66
    %vm68 = vcmp.eq.s32.totalorder %v37, %v67
    %69 = vset.pattern.permute.xlu0 2
    %70 = vperm.xlu0 %69, %v42
    %v71 = vpop.permute.xlu0 %70
    %vm72 = vcmp.eq.s32.totalorder %v71, 1
    %vm73 = vmand %vm68, %vm72
    %v74 = vsel %vm73, 1, 0
    %v75 = vcvt.s32.f32 %v74
    %v76 = vadd.f32 %v63, %v75
    %v77 = vadd.s32 %v32, 24
    %78 = vset.pattern.permute.xlu0 3
    %79 = vperm.xlu0 %78, %v77
    %v80 = vpop.permute.xlu0 %79
    %vm81 = vcmp.eq.s32.totalorder %v37, %v80
    %82 = vset.pattern.permute.xlu0 3
    %83 = vperm.xlu0 %82, %v42
    %v84 = vpop.permute.xlu0 %83
    %vm85 = vcmp.eq.s32.totalorder %v84, 1
    %vm86 = vmand %vm81, %vm85
    %v87 = vsel %vm86, 1, 0
    %v88 = vcvt.s32.f32 %v87
    %v89 = vadd.f32 %v76, %v88
    %v90 = vld [vmem:[#allocation2] sm:$0xff]
    %v91 = vld [vmem:[#allocation2 + $0x8] sm:$0xff]
    %v92 = vld [vmem:[#allocation2 + $0x10] sm:$0xff]
    %v93 = vld [vmem:[#allocation2 + $0x18] sm:$0xff]
    %vm94 = vcmask 261120
    %v96 = vsel %vm94, %v89, 0
    %98 = vmatpush.msra.mxu0 0.0
    %99 = vmatpush.msra.mxu0 0.0
    %100 = vmatpush.msra.mxu0 0.0
    %101 = vmatpush.msra.mxu0 0.0
    %102 = vmatpush.msra.mxu0 0.0
    %103 = vmatpush.msra.mxu0 0.0
    %104 = vmatpush.msra.mxu0 0.0
    %105 = vmatpush.msra.mxu0 0.0
    %106 = vmatpush.msra.mxu0 0.0
    %107 = vmatpush.msra.mxu0 0.0
    %108 = vmatpush.msra.mxu0 0.0
    %109 = vmatpush.msra.mxu0 0.0
    %v110 = vand.u32 %v93, 4294901760
    %111 = vmatpush.msra.mxu0 %v110
    %v112 = vand.u32 %v92, 4294901760
    %113 = vmatpush.msra.mxu0 %v112
    %v114 = vand.u32 %v91, 4294901760
    %115 = vmatpush.msra.mxu0 %v114
    %v116 = vand.u32 %v90, 4294901760
    %117 = vmatpush.msra.mxu0 %v116
    %v118 = vand.u32 %v96, 4294901760
    %v119 = vsub.f32 %v96, %v118
    %v120 = vand.u32 %v119, 4294901760
    %v121 = vsub.f32 %v119, %v120
    %v122 = vand.u32 %v121, 4294901760
    %123 = vmatmul.f32.gmra.mxu0 %v122
    %v124 = vpop.f32.mrf.mxu0
    %v125 = vadd.f32 0.0, %v124
    %126 = vdwg.mxu0
    %127 = vmatpush.msra.mxu0 0.0
    %128 = vmatpush.msra.mxu0 0.0
    %129 = vmatpush.msra.mxu0 0.0
    %130 = vmatpush.msra.mxu0 0.0
    %131 = vmatpush.msra.mxu0 0.0
    %132 = vmatpush.msra.mxu0 0.0
    %133 = vmatpush.msra.mxu0 0.0
    %134 = vmatpush.msra.mxu0 0.0
    %135 = vmatpush.msra.mxu0 0.0
    %136 = vmatpush.msra.mxu0 0.0
    %137 = vmatpush.msra.mxu0 0.0
    %138 = vmatpush.msra.mxu0 0.0
    %v139 = vand.u32 %v93, 4294901760
    %v140 = vsub.f32 %v93, %v139
    %v141 = vand.u32 %v140, 4294901760
    %v142 = vsub.f32 %v140, %v141
    %v143 = vand.u32 %v142, 4294901760
    %144 = vmatpush.msra.mxu0 %v143
    %v145 = vand.u32 %v92, 4294901760
    %v146 = vsub.f32 %v92, %v145
    %v147 = vand.u32 %v146, 4294901760
    %v148 = vsub.f32 %v146, %v147
    %v149 = vand.u32 %v148, 4294901760
    %150 = vmatpush.msra.mxu0 %v149
    %v151 = vand.u32 %v91, 4294901760
    %v152 = vsub.f32 %v91, %v151
    %v153 = vand.u32 %v152, 4294901760
    %v154 = vsub.f32 %v152, %v153
    %v155 = vand.u32 %v154, 4294901760
    %156 = vmatpush.msra.mxu0 %v155
    %v157 = vand.u32 %v90, 4294901760
    %v158 = vsub.f32 %v90, %v157
    %v159 = vand.u32 %v158, 4294901760
    %v160 = vsub.f32 %v158, %v159
    %v161 = vand.u32 %v160, 4294901760
    %162 = vmatpush.msra.mxu0 %v161
    %v163 = vand.u32 %v96, 4294901760
    %164 = vmatmul.f32.gmra.mxu0 %v163
    %v165 = vpop.f32.mrf.mxu0
    %v166 = vadd.f32 %v125, %v165
    %167 = vdwg.mxu0
    %168 = vmatpush.msra.mxu0 0.0
    %169 = vmatpush.msra.mxu0 0.0
    %170 = vmatpush.msra.mxu0 0.0
    %171 = vmatpush.msra.mxu0 0.0
    %172 = vmatpush.msra.mxu0 0.0
    %173 = vmatpush.msra.mxu0 0.0
    %174 = vmatpush.msra.mxu0 0.0
    %175 = vmatpush.msra.mxu0 0.0
    %176 = vmatpush.msra.mxu0 0.0
    %177 = vmatpush.msra.mxu0 0.0
    %178 = vmatpush.msra.mxu0 0.0
    %179 = vmatpush.msra.mxu0 0.0
    %v180 = vand.u32 %v93, 4294901760
    %v181 = vsub.f32 %v93, %v180
    %182 = vmatpush.msra.mxu0 %v181
    %v183 = vand.u32 %v92, 4294901760
    %v184 = vsub.f32 %v92, %v183
    %185 = vmatpush.msra.mxu0 %v184
    %v186 = vand.u32 %v91, 4294901760
    %v187 = vsub.f32 %v91, %v186
    %188 = vmatpush.msra.mxu0 %v187
    %v189 = vand.u32 %v90, 4294901760
    %v190 = vsub.f32 %v90, %v189
    %191 = vmatpush.msra.mxu0 %v190
    %v192 = vand.u32 %v96, 4294901760
    %v193 = vsub.f32 %v96, %v192
    %194 = vmatmul.f32.gmra.mxu0 %v193
    %v195 = vpop.f32.mrf.mxu0
    %v196 = vadd.f32 %v166, %v195
    %197 = vdwg.mxu0
    %198 = vmatpush.msra.mxu0 0.0
    %199 = vmatpush.msra.mxu0 0.0
    %200 = vmatpush.msra.mxu0 0.0
    %201 = vmatpush.msra.mxu0 0.0
    %202 = vmatpush.msra.mxu0 0.0
    %203 = vmatpush.msra.mxu0 0.0
    %204 = vmatpush.msra.mxu0 0.0
    %205 = vmatpush.msra.mxu0 0.0
    %206 = vmatpush.msra.mxu0 0.0
    %207 = vmatpush.msra.mxu0 0.0
    %208 = vmatpush.msra.mxu0 0.0
    %209 = vmatpush.msra.mxu0 0.0
    %v210 = vand.u32 %v93, 4294901760
    %211 = vmatpush.msra.mxu0 %v210
    %v212 = vand.u32 %v92, 4294901760
    %213 = vmatpush.msra.mxu0 %v212
    %v214 = vand.u32 %v91, 4294901760
    %215 = vmatpush.msra.mxu0 %v214
    %v216 = vand.u32 %v90, 4294901760
    %217 = vmatpush.msra.mxu0 %v216
    %v218 = vand.u32 %v96, 4294901760
    %v219 = vsub.f32 %v96, %v218
    %v220 = vand.u32 %v219, 4294901760
    %221 = vmatmul.f32.gmra.mxu0 %v220
    %v222 = vpop.f32.mrf.mxu0
    %v223 = vadd.f32 %v196, %v222
    %224 = vdwg.mxu0
    %225 = vmatpush.msra.mxu0 0.0
    %226 = vmatpush.msra.mxu0 0.0
    %227 = vmatpush.msra.mxu0 0.0
    %228 = vmatpush.msra.mxu0 0.0
    %229 = vmatpush.msra.mxu0 0.0
    %230 = vmatpush.msra.mxu0 0.0
    %231 = vmatpush.msra.mxu0 0.0
    %232 = vmatpush.msra.mxu0 0.0
    %233 = vmatpush.msra.mxu0 0.0
    %234 = vmatpush.msra.mxu0 0.0
    %235 = vmatpush.msra.mxu0 0.0
    %236 = vmatpush.msra.mxu0 0.0
    %v237 = vand.u32 %v93, 4294901760
    %v238 = vsub.f32 %v93, %v237
    %v239 = vand.u32 %v238, 4294901760
    %240 = vmatpush.msra.mxu0 %v239
    %v241 = vand.u32 %v92, 4294901760
    %v242 = vsub.f32 %v92, %v241
    %v243 = vand.u32 %v242, 4294901760
    %244 = vmatpush.msra.mxu0 %v243
    %v245 = vand.u32 %v91, 4294901760
    %v246 = vsub.f32 %v91, %v245
    %v247 = vand.u32 %v246, 4294901760
    %248 = vmatpush.msra.mxu0 %v247
    %v249 = vand.u32 %v90, 4294901760
    %v250 = vsub.f32 %v90, %v249
    %v251 = vand.u32 %v250, 4294901760
    %252 = vmatpush.msra.mxu0 %v251
    %v253 = vand.u32 %v96, 4294901760
    %254 = vmatmul.f32.gmra.mxu0 %v253
    %v255 = vpop.f32.mrf.mxu0
    %v256 = vadd.f32 %v223, %v255
    %257 = vdwg.mxu0
    %258 = vmatpush.msra.mxu0 0.0
    %259 = vmatpush.msra.mxu0 0.0
    %260 = vmatpush.msra.mxu0 0.0
    %261 = vmatpush.msra.mxu0 0.0
    %262 = vmatpush.msra.mxu0 0.0
    %263 = vmatpush.msra.mxu0 0.0
    %264 = vmatpush.msra.mxu0 0.0
    %265 = vmatpush.msra.mxu0 0.0
    %266 = vmatpush.msra.mxu0 0.0
    %267 = vmatpush.msra.mxu0 0.0
    %268 = vmatpush.msra.mxu0 0.0
    %269 = vmatpush.msra.mxu0 0.0
    %v270 = vand.u32 %v93, 4294901760
    %271 = vmatpush.msra.mxu0 %v270
    %v272 = vand.u32 %v92, 4294901760
    %273 = vmatpush.msra.mxu0 %v272
    %v274 = vand.u32 %v91, 4294901760
    %275 = vmatpush.msra.mxu0 %v274
    %v276 = vand.u32 %v90, 4294901760
    %277 = vmatpush.msra.mxu0 %v276
    %v278 = vand.u32 %v96, 4294901760
    %279 = vmatmul.f32.gmra.mxu0 %v278
    %v280 = vpop.f32.mrf.mxu0
    %v281 = vadd.f32 %v256, %v280
    %282 = vdwg.mxu0
    %283 = vst [vmem:[#allocation5] sm:$0xff] %v281
    // Predicated region
    $region14: #{tpu_custom_call.1} parent=1 // pred_check
      _
    $region15: #{tpu_custom_call.1} parent=1 // pred_check_branch
      %285 = sbr.rel (0) target = $region17
    $region16: #{tpu_custom_call.1} parent=1 // pred_region
      %287 = vsyncadd [#allocation4], 0
      %s289 = sshll.u32 [#allocation5], 4
      %s290 = int_to_ptr.vmem [resolvable:$true] %s289
      %s291 = sshll.u32 %s2, 4
      %s292 = int_to_ptr.hbm [resolvable:$true] %s291
      %294 = dma.vmem_to_hbm [thread:$0]  %s290, 128, %s292, [#allocation4]
    $region17: #{tpu_custom_call.1} parent=1 // pred_fallthru
      _
    // Predicated region
    $region18: #{tpu_custom_call.1} parent=1 // pred_check
      _
    $region19: #{tpu_custom_call.1} parent=1 // pred_check_branch
      %296 = sbr.rel (0) target = $region21
    $region20: #{tpu_custom_call.1} parent=1 // pred_region
      %298 = dma.done [#allocation4], 128
    $region21: #{tpu_custom_call.1} parent=1 // pred_fallthru
      _
    %299 = vsyncpa [#allocation3], 1
    %300 = vsyncpa [#allocation4], 1

// kernel: tpu_custom_call.1
$region0: #{tpu_custom_call.1}
  #allocation0 [shape = 'u32[]', space=smem, size = 0x4, offset = 0x4, fixed_abs, tag = 'smem constant byte address 0x4 - core index']
  #allocation1 [shape = 'u32[72,128]{1,0:T(1,128)}', space=vmem, size = 0x9000, scoped, tag = 'internal scratch']
  %s0 = inlined_call_operand.vmem [shape: f32[8,4], index: 0, kind: input, shape index: {}]
  %s1 = inlined_call_operand.hbm [shape: f32[32,128], index: 1, kind: input, shape index: {}]
  %s2 = inlined_call_operand.hbm [shape: f32[8,128], index: 2, kind: output, shape index: {}]
  %s3 = sld [smem:[#allocation0]]
  $region22: #{tpu_custom_call.1} parent=0
    _
  %s5 = ssub.s32 1, %s3
  %s6 = scalar_select 0, %s5, %s3
  $region1: #{tpu_custom_call.1} parent=0
    #allocation2 [shape = 'u8[16384]{0}', space=vmem, size = 0x4000, scoped, tag = 'input window, operand 1, single buffered']
    #allocation3 [shape = 's32[1]{0}', space=sflag, size = 0x4, scoped, tag = 'scoped memory for tpu_custom_call.1']
    #allocation4 [shape = 's32[1]{0}', space=sflag, size = 0x4, scoped, tag = 'scoped memory for tpu_custom_call.1']
    #allocation5 [shape = 'u8[4096]{0}', space=vmem, size = 0x1000, scoped, tag = 'output window, operand 0, single buffered']
    %7 = vsyncpa [#allocation3], 0
    %8 = vsyncpa [#allocation4], 0
    // Predicated region
    $region2: #{tpu_custom_call.1} parent=1 // pred_check
      _
    $region3: #{tpu_custom_call.1} parent=1 // pred_check_branch
      %10 = sbr.rel (0) target = $region5
    $region4: #{tpu_custom_call.1} parent=1 // pred_region
      _
    $region5: #{tpu_custom_call.1} parent=1 // pred_fallthru
      _
    // Predicated region
    $region6: #{tpu_custom_call.1} parent=1 // pred_check
      _
    $region7: #{tpu_custom_call.1} parent=1 // pred_check_branch
      %12 = sbr.rel (0) target = $region9
    $region8: #{tpu_custom_call.1} parent=1 // pred_region
      %14 = vsyncadd [#allocation3], 0
      %s15 = sshll.u32 %s1, 4
      %s16 = int_to_ptr.hbm [resolvable:$true] %s15
      %s17 = sshll.u32 [#allocation2], 4
      %s18 = int_to_ptr.vmem [resolvable:$true] %s17
      %23 = dma.hbm_to_vmem [thread:$0]  %s16, 512, %s18, [#allocation3], 128, 128, 8
    $region9: #{tpu_custom_call.1} parent=1 // pred_fallthru
      _
    // Predicated region
    $region10: #{tpu_custom_call.1} parent=1 // pred_check
      _
    $region11: #{tpu_custom_call.1} parent=1 // pred_check_branch
      %25 = sbr.rel (0) target = $region13
    $region12: #{tpu_custom_call.1} parent=1 // pred_region
      %27 = dma.done [#allocation3], 512
    $region13: #{tpu_custom_call.1} parent=1 // pred_fallthru
      _
    %v28 = vld [vmem:[%s0] sm:$0xff]
    %v29 = vcvt.f32.s32.to.zero.pseudo %v28
    %vm30 = vcmp.lt.s32.totalorder %v29, 0
    %v31 = vadd.s32 %v29, 8
    %v32 = vsel %vm30, %v31, %v29
    %vm33 = vcmp.ge.s32.totalorder %v32, 0
    %vm34 = vcmp.lt.s32.totalorder %v32, 8
    %vm35 = vmand %vm33, %vm34
    %v36 = vlaneseq
    %v37 = vand.u32 %v36, 127
    %38 = vset.pattern.permute.xlu0 0
    %39 = vperm.xlu0 %38, %v32
    %v40 = vpop.permute.xlu0 %39
    %vm41 = vcmp.eq.s32.totalorder %v37, %v40
    %v42 = vsel %vm35, 1, 0
    %43 = vset.pattern.permute.xlu0 0
    %44 = vperm.xlu0 %43, %v42
    %v45 = vpop.permute.xlu0 %44
    %vm46 = vcmp.eq.s32.totalorder %v45, 1
    %vm47 = vmand %vm41, %vm46
    %v48 = vsel %vm47, 1, 0
    %v49 = vcvt.s32.f32 %v48
    %v50 = vadd.f32 %v49, 0.0
    %v51 = vadd.s32 %v32, 8
    %52 = vset.pattern.permute.xlu0 1
    %53 = vperm.xlu0 %52, %v51
    %v54 = vpop.permute.xlu0 %53
    %vm55 = vcmp.eq.s32.totalorder %v37, %v54
    %56 = vset.pattern.permute.xlu0 1
    %57 = vperm.xlu0 %56, %v42
    %v58 = vpop.permute.xlu0 %57
    %vm59 = vcmp.eq.s32.totalorder %v58, 1
    %vm60 = vmand %vm55, %vm59
    %v61 = vsel %vm60, 1, 0
    %v62 = vcvt.s32.f32 %v61
    %v63 = vadd.f32 %v50, %v62
    %v64 = vadd.s32 %v32, 16
    %65 = vset.pattern.permute.xlu0 2
    %66 = vperm.xlu0 %65, %v64
    %v67 = vpop.permute.xlu0 %66
    %vm68 = vcmp.eq.s32.totalorder %v37, %v67
    %69 = vset.pattern.permute.xlu0 2
    %70 = vperm.xlu0 %69, %v42
    %v71 = vpop.permute.xlu0 %70
    %vm72 = vcmp.eq.s32.totalorder %v71, 1
    %vm73 = vmand %vm68, %vm72
    %v74 = vsel %vm73, 1, 0
    %v75 = vcvt.s32.f32 %v74
    %v76 = vadd.f32 %v63, %v75
    %v77 = vadd.s32 %v32, 24
    %78 = vset.pattern.permute.xlu0 3
    %79 = vperm.xlu0 %78, %v77
    %v80 = vpop.permute.xlu0 %79
    %vm81 = vcmp.eq.s32.totalorder %v37, %v80
    %82 = vset.pattern.permute.xlu0 3
    %83 = vperm.xlu0 %82, %v42
    %v84 = vpop.permute.xlu0 %83
    %vm85 = vcmp.eq.s32.totalorder %v84, 1
    %vm86 = vmand %vm81, %vm85
    %v87 = vsel %vm86, 1, 0
    %v88 = vcvt.s32.f32 %v87
    %v89 = vadd.f32 %v76, %v88
    %v90 = vld [vmem:[#allocation2] sm:$0xff]
    %v91 = vld [vmem:[#allocation2 + $0x8] sm:$0xff]
    %v92 = vld [vmem:[#allocation2 + $0x10] sm:$0xff]
    %v93 = vld [vmem:[#allocation2 + $0x18] sm:$0xff]
    %vm94 = vcmask 261120
    %v96 = vsel %vm94, %v89, 0
    %98 = vmatpush.msra.mxu0 0.0
    %99 = vmatpush.msra.mxu0 0.0
    %100 = vmatpush.msra.mxu0 0.0
    %101 = vmatpush.msra.mxu0 0.0
    %102 = vmatpush.msra.mxu0 0.0
    %103 = vmatpush.msra.mxu0 0.0
    %104 = vmatpush.msra.mxu0 0.0
    %105 = vmatpush.msra.mxu0 0.0
    %106 = vmatpush.msra.mxu0 0.0
    %107 = vmatpush.msra.mxu0 0.0
    %108 = vmatpush.msra.mxu0 0.0
    %109 = vmatpush.msra.mxu0 0.0
    %v110 = vand.u32 %v93, 4294901760
    %111 = vmatpush.msra.mxu0 %v110
    %v112 = vand.u32 %v92, 4294901760
    %113 = vmatpush.msra.mxu0 %v112
    %v114 = vand.u32 %v91, 4294901760
    %115 = vmatpush.msra.mxu0 %v114
    %v116 = vand.u32 %v90, 4294901760
    %117 = vmatpush.msra.mxu0 %v116
    %v118 = vand.u32 %v96, 4294901760
    %v119 = vsub.f32 %v96, %v118
    %v120 = vand.u32 %v119, 4294901760
    %v121 = vsub.f32 %v119, %v120
    %v122 = vand.u32 %v121, 4294901760
    %123 = vmatmul.f32.gmra.mxu0 %v122
    %v124 = vpop.f32.mrf.mxu0
    %v125 = vadd.f32 0.0, %v124
    %126 = vdwg.mxu0
    %127 = vmatpush.msra.mxu0 0.0
    %128 = vmatpush.msra.mxu0 0.0
    %129 = vmatpush.msra.mxu0 0.0
    %130 = vmatpush.msra.mxu0 0.0
    %131 = vmatpush.msra.mxu0 0.0
    %132 = vmatpush.msra.mxu0 0.0
    %133 = vmatpush.msra.mxu0 0.0
    %134 = vmatpush.msra.mxu0 0.0
    %135 = vmatpush.msra.mxu0 0.0
    %136 = vmatpush.msra.mxu0 0.0
    %137 = vmatpush.msra.mxu0 0.0
    %138 = vmatpush.msra.mxu0 0.0
    %v139 = vand.u32 %v93, 4294901760
    %v140 = vsub.f32 %v93, %v139
    %v141 = vand.u32 %v140, 4294901760
    %v142 = vsub.f32 %v140, %v141
    %v143 = vand.u32 %v142, 4294901760
    %144 = vmatpush.msra.mxu0 %v143
    %v145 = vand.u32 %v92, 4294901760
    %v146 = vsub.f32 %v92, %v145
    %v147 = vand.u32 %v146, 4294901760
    %v148 = vsub.f32 %v146, %v147
    %v149 = vand.u32 %v148, 4294901760
    %150 = vmatpush.msra.mxu0 %v149
    %v151 = vand.u32 %v91, 4294901760
    %v152 = vsub.f32 %v91, %v151
    %v153 = vand.u32 %v152, 4294901760
    %v154 = vsub.f32 %v152, %v153
    %v155 = vand.u32 %v154, 4294901760
    %156 = vmatpush.msra.mxu0 %v155
    %v157 = vand.u32 %v90, 4294901760
    %v158 = vsub.f32 %v90, %v157
    %v159 = vand.u32 %v158, 4294901760
    %v160 = vsub.f32 %v158, %v159
    %v161 = vand.u32 %v160, 4294901760
    %162 = vmatpush.msra.mxu0 %v161
    %v163 = vand.u32 %v96, 4294901760
    %164 = vmatmul.f32.gmra.mxu0 %v163
    %v165 = vpop.f32.mrf.mxu0
    %v166 = vadd.f32 %v125, %v165
    %167 = vdwg.mxu0
    %168 = vmatpush.msra.mxu0 0.0
    %169 = vmatpush.msra.mxu0 0.0
    %170 = vmatpush.msra.mxu0 0.0
    %171 = vmatpush.msra.mxu0 0.0
    %172 = vmatpush.msra.mxu0 0.0
    %173 = vmatpush.msra.mxu0 0.0
    %174 = vmatpush.msra.mxu0 0.0
    %175 = vmatpush.msra.mxu0 0.0
    %176 = vmatpush.msra.mxu0 0.0
    %177 = vmatpush.msra.mxu0 0.0
    %178 = vmatpush.msra.mxu0 0.0
    %179 = vmatpush.msra.mxu0 0.0
    %v180 = vand.u32 %v93, 4294901760
    %v181 = vsub.f32 %v93, %v180
    %182 = vmatpush.msra.mxu0 %v181
    %v183 = vand.u32 %v92, 4294901760
    %v184 = vsub.f32 %v92, %v183
    %185 = vmatpush.msra.mxu0 %v184
    %v186 = vand.u32 %v91, 4294901760
    %v187 = vsub.f32 %v91, %v186
    %188 = vmatpush.msra.mxu0 %v187
    %v189 = vand.u32 %v90, 4294901760
    %v190 = vsub.f32 %v90, %v189
    %191 = vmatpush.msra.mxu0 %v190
    %v192 = vand.u32 %v96, 4294901760
    %v193 = vsub.f32 %v96, %v192
    %194 = vmatmul.f32.gmra.mxu0 %v193
    %v195 = vpop.f32.mrf.mxu0
    %v196 = vadd.f32 %v166, %v195
    %197 = vdwg.mxu0
    %198 = vmatpush.msra.mxu0 0.0
    %199 = vmatpush.msra.mxu0 0.0
    %200 = vmatpush.msra.mxu0 0.0
    %201 = vmatpush.msra.mxu0 0.0
    %202 = vmatpush.msra.mxu0 0.0
    %203 = vmatpush.msra.mxu0 0.0
    %204 = vmatpush.msra.mxu0 0.0
    %205 = vmatpush.msra.mxu0 0.0
    %206 = vmatpush.msra.mxu0 0.0
    %207 = vmatpush.msra.mxu0 0.0
    %208 = vmatpush.msra.mxu0 0.0
    %209 = vmatpush.msra.mxu0 0.0
    %v210 = vand.u32 %v93, 4294901760
    %211 = vmatpush.msra.mxu0 %v210
    %v212 = vand.u32 %v92, 4294901760
    %213 = vmatpush.msra.mxu0 %v212
    %v214 = vand.u32 %v91, 4294901760
    %215 = vmatpush.msra.mxu0 %v214
    %v216 = vand.u32 %v90, 4294901760
    %217 = vmatpush.msra.mxu0 %v216
    %v218 = vand.u32 %v96, 4294901760
    %v219 = vsub.f32 %v96, %v218
    %v220 = vand.u32 %v219, 4294901760
    %221 = vmatmul.f32.gmra.mxu0 %v220
    %v222 = vpop.f32.mrf.mxu0
    %v223 = vadd.f32 %v196, %v222
    %224 = vdwg.mxu0
    %225 = vmatpush.msra.mxu0 0.0
    %226 = vmatpush.msra.mxu0 0.0
    %227 = vmatpush.msra.mxu0 0.0
    %228 = vmatpush.msra.mxu0 0.0
    %229 = vmatpush.msra.mxu0 0.0
    %230 = vmatpush.msra.mxu0 0.0
    %231 = vmatpush.msra.mxu0 0.0
    %232 = vmatpush.msra.mxu0 0.0
    %233 = vmatpush.msra.mxu0 0.0
    %234 = vmatpush.msra.mxu0 0.0
    %235 = vmatpush.msra.mxu0 0.0
    %236 = vmatpush.msra.mxu0 0.0
    %v237 = vand.u32 %v93, 4294901760
    %v238 = vsub.f32 %v93, %v237
    %v239 = vand.u32 %v238, 4294901760
    %240 = vmatpush.msra.mxu0 %v239
    %v241 = vand.u32 %v92, 4294901760
    %v242 = vsub.f32 %v92, %v241
    %v243 = vand.u32 %v242, 4294901760
    %244 = vmatpush.msra.mxu0 %v243
    %v245 = vand.u32 %v91, 4294901760
    %v246 = vsub.f32 %v91, %v245
    %v247 = vand.u32 %v246, 4294901760
    %248 = vmatpush.msra.mxu0 %v247
    %v249 = vand.u32 %v90, 4294901760
    %v250 = vsub.f32 %v90, %v249
    %v251 = vand.u32 %v250, 4294901760
    %252 = vmatpush.msra.mxu0 %v251
    %v253 = vand.u32 %v96, 4294901760
    %254 = vmatmul.f32.gmra.mxu0 %v253
    %v255 = vpop.f32.mrf.mxu0
    %v256 = vadd.f32 %v223, %v255
    %257 = vdwg.mxu0
    %258 = vmatpush.msra.mxu0 0.0
    %259 = vmatpush.msra.mxu0 0.0
    %260 = vmatpush.msra.mxu0 0.0
    %261 = vmatpush.msra.mxu0 0.0
    %262 = vmatpush.msra.mxu0 0.0
    %263 = vmatpush.msra.mxu0 0.0
    %264 = vmatpush.msra.mxu0 0.0
    %265 = vmatpush.msra.mxu0 0.0
    %266 = vmatpush.msra.mxu0 0.0
    %267 = vmatpush.msra.mxu0 0.0
    %268 = vmatpush.msra.mxu0 0.0
    %269 = vmatpush.msra.mxu0 0.0
    %v270 = vand.u32 %v93, 4294901760
    %271 = vmatpush.msra.mxu0 %v270
    %v272 = vand.u32 %v92, 4294901760
    %273 = vmatpush.msra.mxu0 %v272
    %v274 = vand.u32 %v91, 4294901760
    %275 = vmatpush.msra.mxu0 %v274
    %v276 = vand.u32 %v90, 4294901760
    %277 = vmatpush.msra.mxu0 %v276
    %v278 = vand.u32 %v96, 4294901760
    %279 = vmatmul.f32.gmra.mxu0 %v278
    %v280 = vpop.f32.mrf.mxu0
    %v281 = vadd.f32 %v256, %v280
    %282 = vdwg.mxu0
    %283 = vst [vmem:[#allocation5] sm:$0xff] %v281
    // Predicated region
    $region14: #{tpu_custom_call.1} parent=1 // pred_check
      _
    $region15: #{tpu_custom_call.1} parent=1 // pred_check_branch
      %285 = sbr.rel (0) target = $region17
    $region16: #{tpu_custom_call.1} parent=1 // pred_region
      %287 = vsyncadd [#allocation4], 0
      %s289 = sshll.u32 [#allocation5], 4
      %s290 = int_to_ptr.vmem [resolvable:$true] %s289
      %s291 = sshll.u32 %s2, 4
      %s292 = int_to_ptr.hbm [resolvable:$true] %s291
      %294 = dma.vmem_to_hbm [thread:$0]  %s290, 128, %s292, [#allocation4]
    $region17: #{tpu_custom_call.1} parent=1 // pred_fallthru
      _
    // Predicated region
    $region18: #{tpu_custom_call.1} parent=1 // pred_check
      _
    $region19: #{tpu_custom_call.1} parent=1 // pred_check_branch
      %296 = sbr.rel (0) target = $region21
    $region20: #{tpu_custom_call.1} parent=1 // pred_region
      %298 = dma.done [#allocation4], 128
    $region21: #{tpu_custom_call.1} parent=1 // pred_fallthru
      _
    %299 = vsyncpa [#allocation3], 1
    %300 = vsyncpa [#allocation4], 1

</llo_original>
